<compile_context>
chip_gen: v7x
topology: tpu7x:2x2x1
jax: 0.10.0
libtpu: 0.0.40
codegen_flags: <defaults>
</compile_context>

<pallas_src>
import functools
import math

import jax
import jax.numpy as jnp
from jax.experimental import pallas as pl
from jax.experimental.pallas import tpu as pltpu


# ----------------------------- Pallas kernel --------------------------------

def _merge_conv_kernel(a_ref, w_ref, b_ref, o_ref):
    # a_ref: (G*K, TL)   bf16 im2col patches, spatial on lanes
    # w_ref: (G*OG, G*K) bf16 block-diagonal weights (VMEM-resident)
    # b_ref: (G*OG, 1)   f32 bias (VMEM-resident)
    # o_ref: (G*OG, TL)  f32 output, lane-dense stores
    acc = jnp.dot(w_ref[...], a_ref[...], preferred_element_type=jnp.float32)
    o_ref[...] = (acc + b_ref[...]).astype(o_ref.dtype)   # f32 bias add (v5e-safe)


def _pick_lane_tile(L, max_tl=2048):
    """Largest lane tile <= max_tl: prefer /256 divisors (full MXU width on
    v6e/v7x), then /128 (v5e native); otherwise use the full dim (always legal)."""
    for unit in (256, 128):
        if L % unit == 0:
            tl = unit
            while tl * 2 <= max_tl and L % (tl * 2) == 0:
                tl *= 2
            return tl
    return L


def _padded_vmem_bytes(shape, dtype):
    """Bytes of one VMEM buffer rounded up to (8, 128) hardware tiles."""
    itemsize = jnp.dtype(dtype).itemsize
    sub = -(-shape[-2] // 8) * 8
    lane = -(-shape[-1] // 128) * 128
    lead = math.prod(shape[:-2]) if len(shape) > 2 else 1
    return lead * sub * lane * itemsize


def merge_conv_matmul(A, W_bd, bias_col, *, lane_tile=None, interpret=False):
    """A: (b, G*K, L) bf16;  W_bd: (G*OG, G*K) bf16;  bias_col: (G*OG, 1) f32
    -> (b, G*OG, L) f32."""
    b, GK, L = A.shape
    GOG = W_bd.shape[0]
    tl = lane_tile or _pick_lane_tile(L)
    assert L % tl == 0
    grid = (b, L // tl)

    # VMEM budget: double-buffered A tile + resident W/bias + double-buffered
    # out tile, with 4x headroom, clamped to stay well inside v7x's 64 MiB.
    tile_bytes = (2 * _padded_vmem_bytes((GK, tl), A.dtype)
                  + 2 * _padded_vmem_bytes((GOG, GK), W_bd.dtype)
                  + 2 * _padded_vmem_bytes((GOG, 1), bias_col.dtype)
                  + 2 * _padded_vmem_bytes((GOG, tl), jnp.float32))
    vmem_limit = int(min(48 * 2**20, max(4 * 2**20, 4 * tile_bytes)))

    cost = pl.CostEstimate(
        flops=2 * b * GOG * GK * L,
        transcendentals=0,
        bytes_accessed=int(A.size * A.dtype.itemsize
                           + W_bd.size * W_bd.dtype.itemsize
                           + bias_col.size * 4
                           + b * GOG * L * 4),
    )

    return pl.pallas_call(
        _merge_conv_kernel,
        out_shape=jax.ShapeDtypeStruct((b, GOG, L), jnp.float32),
        grid_spec=pltpu.PrefetchScalarGridSpec(
            num_scalar_prefetch=0,
            grid=grid,
            in_specs=[
                # batch dim squeezed out of the kernel view (None => Squeezed)
                pl.BlockSpec((None, GK, tl), lambda bi, li: (bi, 0, li)),
                pl.BlockSpec((GOG, GK), lambda bi, li: (0, 0)),   # resident
                pl.BlockSpec((GOG, 1), lambda bi, li: (0, 0)),    # resident
            ],
            out_specs=pl.BlockSpec((None, GOG, tl), lambda bi, li: (bi, 0, li)),
        ),
        compiler_params=pltpu.CompilerParams(
            dimension_semantics=("parallel", "parallel"),
            vmem_limit_bytes=vmem_limit),
        cost_estimate=cost,
        interpret=interpret,
    )(A, W_bd, bias_col)


# ------------------------------- JAX glue ------------------------------------

def _im2col_group(xg, pad, dil, kh, kw):
    """xg: (b, cg, h, w) -> (b, cg*kh*kw, h*w), matching F.unfold channel order."""
    b, cg, h, w = xg.shape
    xp = jnp.pad(xg, ((0, 0), (0, 0), (pad, pad), (pad, pad)))
    taps = [xp[:, :, ki * dil:ki * dil + h, kj * dil:kj * dil + w]
            for ki in range(kh) for kj in range(kw)]
    t = jnp.stack(taps, axis=2)                 # (b, cg, kh*kw, h, w)
    return t.reshape(b, cg * kh * kw, h * w)    # F.unfold layout (b, C*kh*kw, L)


def merge_conv2d_forward(x, weight, bias, *, kernel_size=(3, 3),
                         padding=(1, 6, 12, 18), dilation=(1, 6, 12, 18),
                         groups=4, compute_dtype=jnp.bfloat16):
    """x: (b, in_ch, h, w) NCHW; weight: (out_ch, in_ch//groups, kh, kw);
    bias: (out_ch,). Returns (b, out_ch, h, w)."""
    b, c, h, w = x.shape
    kh, kw = kernel_size
    out_ch = weight.shape[0]
    cg = c // groups
    og = out_ch // groups
    K = cg * kh * kw
    L = h * w

    # TODO(synk): fuse the im2col into the Pallas kernel (build the 9 dilated
    # taps from a VMEM-resident x tile) to kill the 9x-expanded HBM patch
    # stream entirely; for now we compress that stream to bf16.
    xg = x.reshape(b, groups, cg, h, w)
    A = jnp.concatenate(
        [_im2col_group(xg[:, g], padding[g], dilation[g], kh, kw)
         for g in range(groups)], axis=1)                        # (b, G*K, L)

    # block-diagonal weight (G*OG, G*K): merges the 4 group matmuls into one.
    Wg = weight.reshape(groups, og, K)
    W_bd = jnp.zeros((groups * og, groups * K), dtype=jnp.float32)
    for g in range(groups):
        W_bd = W_bd.at[g * og:(g + 1) * og, g * K:(g + 1) * K].set(Wg[g])

    out = merge_conv_matmul(A.astype(compute_dtype),
                            W_bd.astype(compute_dtype),
                            bias.reshape(groups * og, 1).astype(jnp.float32))
    # (b, G*OG, L) is already NCHW channel order -> just fold spatial back.
    return out.reshape(b, out_ch, h, w)


# --------------------------- reference (pure JAX) -----------------------------

def reference_forward(x, weight, bias, *, padding, dilation, groups):
    c = x.shape[1]
    out_ch = weight.shape[0]
    cg = c // groups
    og = out_ch // groups
    outs = []
    for g in range(groups):
        yg = jax.lax.conv_general_dilated(
            x[:, g * cg:(g + 1) * cg], weight[g * og:(g + 1) * og],
            window_strides=(1, 1),
            padding=((padding[g], padding[g]), (padding[g], padding[g])),
            rhs_dilation=(dilation[g], dilation[g]),
            dimension_numbers=('NCHW', 'OIHW', 'NCHW'),
            precision=jax.lax.Precision.HIGHEST)
        outs.append(yg)
    return jnp.concatenate(outs, axis=1) + bias[None, :, None, None]


# --------------------------------- main ---------------------------------------

if __name__ == "__main__":
    key = jax.random.PRNGKey(0)
    kx, kw_, kb = jax.random.split(key, 3)

    b, in_ch, h, w = 2, 8, 16, 16
    out_ch, groups = 8, 4
    kh = kw = 3
    padding = (1, 6, 12, 18)
    dilation = (1, 6, 12, 18)

    # kaiming_uniform(a=sqrt(5))-equivalent bounds, deterministic
    fan_in = (in_ch // groups) * kh * kw
    bound = 1.0 / math.sqrt(fan_in)
    weight = jax.random.uniform(kw_, (out_ch, in_ch // groups, kh, kw),
                                minval=-bound, maxval=bound, dtype=jnp.float32)
    bias = jax.random.uniform(kb, (out_ch,), minval=-bound, maxval=bound,
                              dtype=jnp.float32)
    x = jax.random.normal(kx, (b, in_ch, h, w), dtype=jnp.float32)

    fwd = jax.jit(functools.partial(
        merge_conv2d_forward, kernel_size=(kh, kw), padding=padding,
        dilation=dilation, groups=groups))
    out = jax.block_until_ready(fwd(x, weight, bias))
    assert out.shape == (b, out_ch, h, w)

    # Tight check: reference fed the same bf16-rounded operands (both paths
    # then accumulate in f32) -> only accumulation-order differences remain.
    x_r = x.astype(jnp.bfloat16).astype(jnp.float32)
    w_r = weight.astype(jnp.bfloat16).astype(jnp.float32)
    ref_rounded = reference_forward(x_r, w_r, bias, padding=padding,
                                    dilation=dilation, groups=groups)
    assert jnp.allclose(out, ref_rounded, rtol=1e-3, atol=1e-3), \
        "mismatch vs bf16-rounded reference"

    # Loose sanity check against the full-f32 reference (bf16 input rounding).
    ref = reference_forward(x, weight, bias, padding=padding,
                            dilation=dilation, groups=groups)
    assert jnp.allclose(out, ref, rtol=1e-1, atol=1e-1), "mismatch vs f32 reference"

    print("KERNEL_OK")
</pallas_src>

<mosaic_0001>
module attributes {stable_mosaic.version = 11 : i64} {
  func.func @_merge_conv_kernel(%arg0: i32, %arg1: i32, %arg2: memref<1x72x256xbf16, #tpu.memory_space<vmem>>, %arg3: memref<8x72xbf16, #tpu.memory_space<vmem>>, %arg4: memref<8x1xf32, #tpu.memory_space<vmem>>, %arg5: memref<1x8x256xf32, #tpu.memory_space<vmem>>) attributes {dimension_semantics = [#tpu.dimension_semantics<parallel>, #tpu.dimension_semantics<parallel>], iteration_bounds = array<i64: 2, 1>, scalar_prefetch = 0 : i64, scratch_operands = 0 : i64, tpu.core_type = #tpu.core_type<tc>, window_params = [{transform_indices = @transform_0, window_bounds = array<i64: 1, 72, 256>}, {pipeline_mode = #tpu.pipeline_mode<synchronous>, transform_indices = @transform_1, window_bounds = array<i64: 8, 72>}, {pipeline_mode = #tpu.pipeline_mode<synchronous>, transform_indices = @transform_2, window_bounds = array<i64: 8, 1>}, {transform_indices = @transform_3, window_bounds = array<i64: 1, 8, 256>}]} {
    %c0 = arith.constant 0 : index
    %c0_0 = arith.constant 0 : index
    %0 = vector.load %arg3[%c0, %c0_0] : memref<8x72xbf16, #tpu.memory_space<vmem>>, vector<8x72xbf16>
    %c0_1 = arith.constant 0 : index
    %c0_2 = arith.constant 0 : index
    %c0_3 = arith.constant 0 : index
    %1 = vector.load %arg2[%c0_1, %c0_2, %c0_3] : memref<1x72x256xbf16, #tpu.memory_space<vmem>>, vector<1x72x256xbf16>
    %2 = vector.shape_cast %1 : vector<1x72x256xbf16> to vector<72x256xbf16>
    %cst = arith.constant dense<0.000000e+00> : vector<8x256xf32>
    %3 = tpu.matmul %0, %2, %cst {dimension_numbers = #tpu.dot_dimension_numbers<[1], [0], [0], [1], [0, 0, 1, 1], [], []>} : vector<8x72xbf16>, vector<72x256xbf16>, vector<8x256xf32> -> vector<8x256xf32>
    %c0_4 = arith.constant 0 : index
    %c0_5 = arith.constant 0 : index
    %4 = vector.load %arg4[%c0_4, %c0_5] : memref<8x1xf32, #tpu.memory_space<vmem>>, vector<8x1xf32>
    %5 = vector.broadcast %4 : vector<8x1xf32> to vector<8x256xf32>
    %6 = arith.addf %3, %5 : vector<8x256xf32>
    %c0_6 = arith.constant 0 : index
    %c0_7 = arith.constant 0 : index
    %c0_8 = arith.constant 0 : index
    %7 = vector.load %arg5[%c0_6, %c0_7, %c0_8] : memref<1x8x256xf32, #tpu.memory_space<vmem>>, vector<1x8x256xf32>
    %8 = vector.shape_cast %7 : vector<1x8x256xf32> to vector<8x256xf32>
    %9 = vector.shape_cast %6 : vector<8x256xf32> to vector<1x8x256xf32>
    tpu.vector_store %arg5[%c0_6, %c0_7, %c0_8], %9 {strides = array<i32>} : memref<1x8x256xf32, #tpu.memory_space<vmem>>, vector<1x8x256xf32>,
    return
  }
  func.func @transform_0(%arg0: i32, %arg1: i32) -> (i32, i32, i32) {
    %c0_i32 = arith.constant 0 : i32
    %c0_i32_0 = arith.constant 0 : i32
    return %arg0, %c0_i32, %arg1 : i32, i32, i32
  }
  func.func @transform_1(%arg0: i32, %arg1: i32) -> (i32, i32) {
    %c0_i32 = arith.constant 0 : i32
    %c0_i32_0 = arith.constant 0 : i32
    %c0_i32_1 = arith.constant 0 : i32
    return %c0_i32, %c0_i32_0 : i32, i32
  }
  func.func @transform_2(%arg0: i32, %arg1: i32) -> (i32, i32) {
    %c0_i32 = arith.constant 0 : i32
    %c0_i32_0 = arith.constant 0 : i32
    %c0_i32_1 = arith.constant 0 : i32
    return %c0_i32, %c0_i32_0 : i32, i32
  }
  func.func @transform_3(%arg0: i32, %arg1: i32) -> (i32, i32, i32) {
    %c0_i32 = arith.constant 0 : i32
    %c0_i32_0 = arith.constant 0 : i32
    return %arg0, %c0_i32, %arg1 : i32, i32, i32
  }
}

</mosaic_0001>

<llo_original>
// kernel: merge_conv2d_forward.1
$region0: #{merge_conv2d_forward.1}
  #allocation0 [shape = 'u32[]', space=smem, size = 0x4, offset = 0x4, fixed_abs, tag = 'smem constant byte address 0x4 - core index']
  #allocation1 [shape = 'u32[144,128]{1,0:T(1,128)}', space=vmem, size = 0x12000, scoped, tag = 'internal scratch']
  %s0 = inlined_call_operand.vmem [shape: bf16[2,72,256], index: 0, kind: input, shape index: {}]
  %s1 = inlined_call_operand.vmem [shape: bf16[8,72], index: 1, kind: input, shape index: {}]
  %s2 = inlined_call_operand.vmem [shape: f32[8,1], index: 2, kind: input, shape index: {}]
  %s3 = inlined_call_operand.vmem [shape: f32[2,8,256], index: 3, kind: output, shape index: {}]
  %s4 = sld [smem:[#allocation0]]
  $region45: #{merge_conv2d_forward.1} parent=0
    _
  %s6 = ssub.s32 1, %s4
  %s7 = scalar_select 0, %s6, %s4
  loop: start=0, step=1, limit=4
  $region2: #{merge_conv2d_forward.1} parent=0 // loop_pre_header
    _
  $region3: #{merge_conv2d_forward.1} parent=0 // loop_header
    %s9 = sphi 0, %s13
    %p10 = scmp.ge.s32.totalorder %s9, 4
    %s16 = sphi 0, %s28
    %s17 = sphi 0, %s24
    %s18 = sphi 0, %s16
    %s19 = sphi 0, %s17
    %s20 = sphi 0, %s18
    %s21 = sphi 0, %s19
    %s33 = sphi 0, %s35
    %s36 = sphi 0, %s33
    %s37 = sphi 0, %s36
    %s53 = sphi 0, %s37
    %s57 = sphi 0, %s57
    %s59 = sphi 0, %s57
    %s60 = sphi 0, %s59
    %s74 = sphi 0, %s60
    %s78 = sphi 0, %s78
    %s80 = sphi 0, %s78
    %s81 = sphi 0, %s80
    %s95 = sphi 0, %s81
    %s103 = sphi 0, %s105
    %s106 = sphi 0, %s103
    %s107 = sphi 0, %s106
    %s123 = sphi 0, %s107
  $region4: #{merge_conv2d_forward.1} parent=0 // loop_header_branch
    %12 = sbr.rel (%p10) target = $region8
  $region5: #{merge_conv2d_forward.1} parent=0 // loop_body
    %s14 = ssub.s32 %s9, 1
    %s15 = ssub.s32 %s9, 2
    %s22 = sadd.s32 1, %s17
    %p23 = scmp.ge.s32.totalorder %s22, 1
    %s24 = scalar_select %p23, 0, %s22
    %s25 = sadd.s32 1, %s16
    %s26 = scalar_select %p23, %s25, %s16
    %p27 = scmp.ge.s32.totalorder %s26, 2
    %s28 = scalar_select %p27, 0, %s26
    %s29 = ssub.s32 %s16, %s28
    %s30 = ssub.s32 %s17, %s24
    %s31 = sor.u32 %s29, %s30
    %p32 = scmp.eq.s32.totalorder %s31, 0
    %s34 = sadd.s32 %s33, 1
    %s35 = scalar_select %p32, %s33, %s34
    %p38 = pneg %p32
    %p39 = scmp.eq.s32.totalorder %s9, 1
    %p40 = por %p38, %p39
    %p41 = scmp.ne.s32.totalorder %s33, %s36
    %p42 = scmp.eq.s32.totalorder %s9, 0
    %p43 = por %p41, %p42
    %p44 = scmp.ne.s32.totalorder %s33, %s36
    %p45 = scmp.eq.s32.totalorder %s14, 1
    %p46 = por %p44, %p45
    %p47 = scmp.ne.s32.totalorder %s36, %s37
    %p48 = scmp.eq.s32.totalorder %s14, 0
    %p49 = por %p47, %p48
    %p50 = scmp.ne.s32.totalorder %s36, %s37
    %p51 = scmp.eq.s32.totalorder %s15, 1
    %p52 = por %p50, %p51
    %p54 = scmp.ne.s32.totalorder %s37, %s53
    %p55 = scmp.eq.s32.totalorder %s15, 0
    %p56 = por %p54, %p55
    %s58 = sadd.s32 %s57, 1
    %p61 = scmp.eq.s32.totalorder %s9, 1
    %p62 = scmp.ne.s32.totalorder %s57, %s59
    %p63 = scmp.eq.s32.totalorder %s9, 0
    %p64 = por %p62, %p63
    %p65 = scmp.ne.s32.totalorder %s57, %s59
    %p66 = scmp.eq.s32.totalorder %s14, 1
    %p67 = por %p65, %p66
    %p68 = scmp.ne.s32.totalorder %s59, %s60
    %p69 = scmp.eq.s32.totalorder %s14, 0
    %p70 = por %p68, %p69
    %p71 = scmp.ne.s32.totalorder %s59, %s60
    %p72 = scmp.eq.s32.totalorder %s15, 1
    %p73 = por %p71, %p72
    %p75 = scmp.ne.s32.totalorder %s60, %s74
    %p76 = scmp.eq.s32.totalorder %s15, 0
    %p77 = por %p75, %p76
    %s79 = sadd.s32 %s78, 1
    %p82 = scmp.eq.s32.totalorder %s9, 1
    %p83 = scmp.ne.s32.totalorder %s78, %s80
    %p84 = scmp.eq.s32.totalorder %s9, 0
    %p85 = por %p83, %p84
    %p86 = scmp.ne.s32.totalorder %s78, %s80
    %p87 = scmp.eq.s32.totalorder %s14, 1
    %p88 = por %p86, %p87
    %p89 = scmp.ne.s32.totalorder %s80, %s81
    %p90 = scmp.eq.s32.totalorder %s14, 0
    %p91 = por %p89, %p90
    %p92 = scmp.ne.s32.totalorder %s80, %s81
    %p93 = scmp.eq.s32.totalorder %s15, 1
    %p94 = por %p92, %p93
    %p96 = scmp.ne.s32.totalorder %s81, %s95
    %p97 = scmp.eq.s32.totalorder %s15, 0
    %p98 = por %p96, %p97
    %s99 = ssub.s32 %s16, %s28
    %s100 = ssub.s32 %s17, %s24
    %s101 = sor.u32 %s99, %s100
    %p102 = scmp.eq.s32.totalorder %s101, 0
    %s104 = sadd.s32 %s103, 1
    %s105 = scalar_select %p102, %s103, %s104
    %p108 = pneg %p102
    %p109 = scmp.eq.s32.totalorder %s9, 1
    %p110 = por %p108, %p109
    %p111 = scmp.ne.s32.totalorder %s103, %s106
    %p112 = scmp.eq.s32.totalorder %s9, 0
    %p113 = por %p111, %p112
    %p114 = scmp.ne.s32.totalorder %s103, %s106
    %p115 = scmp.eq.s32.totalorder %s14, 1
    %p116 = por %p114, %p115
    %p117 = scmp.ne.s32.totalorder %s106, %s107
    %p118 = scmp.eq.s32.totalorder %s14, 0
    %p119 = por %p117, %p118
    %p120 = scmp.ne.s32.totalorder %s106, %s107
    %p121 = scmp.eq.s32.totalorder %s15, 1
    %p122 = por %p120, %p121
    %p124 = scmp.ne.s32.totalorder %s107, %s123
    %p125 = scmp.eq.s32.totalorder %s15, 0
    %p126 = por %p124, %p125
    %p127 = scmp.le.s32.totalorder 1, %s9
    %p128 = scmp.lt.s32.totalorder %s9, 3
    %p129 = pnand %p127, %p128
    %p130 = pneg %p129
    // Predicated region
    $region9: #{merge_conv2d_forward.1} parent=5 // pred_check
      _
    $region10: #{merge_conv2d_forward.1} parent=5 // pred_check_branch
      %132 = sbr.rel (%p129) target = $region12
    $region11: #{merge_conv2d_forward.1} parent=5 // pred_region
      %s133 = ssub.s32 %s9, 1
      // Predicated region
      $region13: #{merge_conv2d_forward.1} parent=11 // pred_check
        %p134 = pneg %p70
      $region14: #{merge_conv2d_forward.1} parent=11 // pred_check_branch
        %136 = sbr.rel (%p134) target = $region16
      $region15: #{merge_conv2d_forward.1} parent=11 // pred_region
        _
      $region16: #{merge_conv2d_forward.1} parent=11 // pred_fallthru
        _
      // Predicated region
      $region17: #{merge_conv2d_forward.1} parent=11 // pred_check
        %p137 = pneg %p91
      $region18: #{merge_conv2d_forward.1} parent=11 // pred_check_branch
        %139 = sbr.rel (%p137) target = $region20
      $region19: #{merge_conv2d_forward.1} parent=11 // pred_region
        _
      $region20: #{merge_conv2d_forward.1} parent=11 // pred_fallthru
        _
    $region12: #{merge_conv2d_forward.1} parent=5 // pred_fallthru
      _
    %p140 = scmp.lt.s32.totalorder %s9, 2
    // Predicated region
    $region21: #{merge_conv2d_forward.1} parent=5 // pred_check
      %p141 = pneg %p140
    $region22: #{merge_conv2d_forward.1} parent=5 // pred_check_branch
      %143 = sbr.rel (%p141) target = $region24
    $region23: #{merge_conv2d_forward.1} parent=5 // pred_region
      // Predicated region
      $region25: #{merge_conv2d_forward.1} parent=23 // pred_check
        %p144 = pneg %p43
      $region26: #{merge_conv2d_forward.1} parent=23 // pred_check_branch
        %146 = sbr.rel (%p144) target = $region28
      $region27: #{merge_conv2d_forward.1} parent=23 // pred_region
        %s147 = smul.u32 2, %s17
        %p148 = scmp.lt.s32.totalorder %s16, 1
        %s149 = scalar_select %p148, %s16, 1
        %p150 = scmp.lt.s32.totalorder %s147, 1
        %s151 = scalar_select %p150, %s147, 1
        %s152 = smul.addr %s149, 18
        %s153 = sadd.s32 %s151, %s152
        %s154 = smul.addr %s153, 4
        %s155 = scalar_lea.vmem %s0, %s154
        %s156 = smul.u32 2, %s17
      $region28: #{merge_conv2d_forward.1} parent=23 // pred_fallthru
        _
    $region24: #{merge_conv2d_forward.1} parent=5 // pred_fallthru
      _
    %p157 = scmp.le.s32.totalorder 1, %s9
    %p158 = scmp.lt.s32.totalorder %s9, 3
    %p159 = pnand %p157, %p158
    %p160 = pneg %p159
    // Predicated region
    $region29: #{merge_conv2d_forward.1} parent=5 // pred_check
      _
    $region30: #{merge_conv2d_forward.1} parent=5 // pred_check_branch
      %162 = sbr.rel (%p159) target = $region32
    $region31: #{merge_conv2d_forward.1} parent=5 // pred_region
      %s163 = ssub.s32 %s9, 1
      %s164 = smul.u32 2, %s19
      %p165 = scmp.lt.s32.totalorder %s18, 1
      %s166 = scalar_select %p165, %s18, 1
      %p167 = scmp.lt.s32.totalorder %s164, 1
      %s168 = scalar_select %p167, %s164, 1
      %s169 = smul.addr %s166, 18
      %s170 = sadd.s32 %s168, %s169
      %s171 = smul.addr %s170, 4
      %s172 = scalar_lea.vmem %s0, %s171
      %p173 = pneg %p49
      %p174 = pneg %p46
      %p175 = pneg %p70
      %p176 = pneg %p67
      %p177 = pneg %p91
      %p178 = pneg %p88
      %p179 = pneg %p119
      %p180 = pneg %p116
      %s181 = smul.u32 2, %s19
      %p182 = scmp.lt.s32.totalorder %s18, 1
      %s183 = scalar_select %p182, %s18, 1
      %p184 = scmp.lt.s32.totalorder %s181, 1
      %s185 = scalar_select %p184, %s181, 1
      %s186 = smul.addr %s183, 2
      %s187 = sadd.s32 %s185, %s186
      %s188 = smul.addr %s187, 8
      %s189 = scalar_lea.vmem %s3, %s188
      %s190 = smul.u32 2, %s19
      %p191 = scmp.lt.s32.totalorder %s18, 1
      %s192 = scalar_select %p191, %s18, 1
      %p193 = scmp.lt.s32.totalorder %s190, 1
      %s194 = scalar_select %p193, %s190, 1
      %s195 = smul.addr %s192, 18
      %s196 = sadd.s32 %s194, %s195
      %s197 = smul.addr %s196, 4
      %s198 = scalar_lea.vmem %s0, %s197
      %s199 = smul.u32 2, %s19
      %s200 = smul.u32 2, %s19
      %p201 = scmp.lt.s32.totalorder %s18, 1
      %s202 = scalar_select %p201, %s18, 1
      %p203 = scmp.lt.s32.totalorder %s200, 1
      %s204 = scalar_select %p203, %s200, 1
      %s205 = smul.addr %s202, 2
      %s206 = sadd.s32 %s204, %s205
      %s207 = smul.addr %s206, 8
      %s208 = scalar_lea.vmem %s3, %s207
      %s209 = smul.u32 2, %s19
      %v211 = vld [vmem:[%s1] sm:$0xf]
      %v212 = vld [vmem:[%s198] sm:$0xff]
      %v213 = vld [vmem:[%s198 + $0x8] sm:$0xff]
      %v214 = vld [vmem:[%s198 + $0x10] sm:$0xff]
      %v215 = vld [vmem:[%s198 + $0x18] sm:$0xff]
      %v216 = vld [vmem:[%s198 + $0x20] sm:$0xff]
      %v217 = vld [vmem:[%s198 + $0x28] sm:$0xff]
      %v218 = vld [vmem:[%s198 + $0x30] sm:$0xff]
      %v219 = vld [vmem:[%s198 + $0x38] sm:$0xff]
      %v220 = vld [vmem:[%s198 + $0x40] sm:$0xff]
      %v221 = vld [vmem:[%s2] sm:$0xff]
      %223 = vset.pattern.permute.xlu0 0
      %224 = vperm.xlu0 %223, %v221
      %v225 = vpop.permute.xlu0 %224
      %v236 = vunpack.c.l.b16 %v212
      %v237 = vunpack.c.h.b16 %v212
      %v238 = vunpack.c.l.b16 %v213
      %v239 = vunpack.c.h.b16 %v213
      %v240 = vunpack.c.l.b16 %v214
      %v241 = vunpack.c.h.b16 %v214
      %v242 = vunpack.c.l.b16 %v215
      %v243 = vunpack.c.h.b16 %v215
      %v244 = vunpack.c.l.b16 %v216
      %v245 = vunpack.c.h.b16 %v216
      %v246 = vunpack.c.l.b16 %v217
      %v247 = vunpack.c.h.b16 %v217
      %v248 = vunpack.c.l.b16 %v218
      %v249 = vunpack.c.h.b16 %v218
      %v250 = vunpack.c.l.b16 %v219
      %v251 = vunpack.c.h.b16 %v219
      %v252 = vunpack.c.l.b16 %v220
      %v253 = vunpack.c.h.b16 %v220
      %v254 = vpack.c.b16 %v238, %v236
      %v255 = vpack.c.b16 %v239, %v237
      %v256 = vpack.c.b16 %v242, %v240
      %v257 = vpack.c.b16 %v243, %v241
      %v258 = vpack.c.b16 %v246, %v244
      %v259 = vpack.c.b16 %v247, %v245
      %v260 = vpack.c.b16 %v250, %v248
      %v261 = vpack.c.b16 %v251, %v249
      %v262 = vpack.c.b16 %v252, %v252
      %v263 = vpack.c.b16 %v253, %v253
      %vm272 = vcmask 588800
      %v274 = vsel %vm272, %v211, 0
      %vm276 = vcmask 1043456
      %v278 = vsel %vm276, %v262, 0
      %v281 = vsel %vm276, %v263, 0
      %283 = vmatprep.subr.bf16.mxu0 %v255
      %284 = vmatpush1.bf16.msra.mxu0 %v254
      %285 = vmatprep.subr.bf16.mxu0 %v257
      %286 = vmatpush1.bf16.msra.mxu0 %v256
      %287 = vmatprep.subr.bf16.mxu0 %v259
      %288 = vmatpush1.bf16.msra.mxu0 %v258
      %289 = vmatprep.subr.bf16.mxu0 %v261
      %290 = vmatpush1.bf16.msra.mxu0 %v260
      %291 = vmatprep.subr.bf16.mxu0 %v281
      %292 = vmatpush1.bf16.msra.mxu0 %v278
      %293 = vmatprep.subr.bf16.mxu0 0
      %294 = vmatpush1.bf16.msra.mxu0 0
      %295 = vmatprep.subr.bf16.mxu0 0
      %296 = vmatpush1.bf16.msra.mxu0 0
      %297 = vmatprep.subr.bf16.mxu0 0
      %298 = vmatpush1.bf16.msra.mxu0 0
      %299 = vmatprep.subr.bf16.mxu0 0
      %300 = vmatpush1.bf16.msra.mxu0 0
      %301 = vmatprep.subr.bf16.mxu0 0
      %302 = vmatpush1.bf16.msra.mxu0 0
      %303 = vmatprep.subr.bf16.mxu0 0
      %304 = vmatpush1.bf16.msra.mxu0 0
      %305 = vmatprep.subr.bf16.mxu0 0
      %306 = vmatpush1.bf16.msra.mxu0 0
      %307 = vmatprep.subr.bf16.mxu0 0
      %308 = vmatpush1.bf16.msra.mxu0 0
      %309 = vmatprep.subr.bf16.mxu0 0
      %310 = vmatpush1.bf16.msra.mxu0 0
      %311 = vmatprep.subr.bf16.mxu0 0
      %312 = vmatpush1.bf16.msra.mxu0 0
      %313 = vmatprep.subr.bf16.mxu0 0
      %314 = vmatpush1.bf16.msra.mxu0 0
      %315 = vmatprep.mubr.bf16.mxu0 0
      %316 = vmatmul.mubr.bf16.gmra.mrb[0].mxu0 %v274
      %v317 = vpop.f32.mrb[0].mxu0
      %v318 = vadd.f32 %v225, %v317
      %v319 = vpop.f32.mrb[0].mxu0
      %v320 = vadd.f32 %v225, %v319
      %v321 = vpop.f32.mrb[0].mxu0
      %v322 = vpop.f32.mrb[0].mxu0
      %323 = vdwg.mxu0
      %324 = vst [vmem:[%s208] sm:$0xff] %v318
      %325 = vst [vmem:[%s208 + $0x8] sm:$0xff] %v320
      %s326 = smul.u32 2, %s19
      %p327 = scmp.lt.s32.totalorder %s18, 1
      %s328 = scalar_select %p327, %s18, 1
      %p329 = scmp.lt.s32.totalorder %s326, 1
      %s330 = scalar_select %p329, %s326, 1
      %s331 = smul.addr %s328, 2
      %s332 = sadd.s32 %s330, %s331
      %s333 = smul.addr %s332, 8
      %s334 = scalar_lea.vmem %s3, %s333
      // Predicated region
      $region33: #{merge_conv2d_forward.1} parent=31 // pred_check
        %p335 = pneg %p116
      $region34: #{merge_conv2d_forward.1} parent=31 // pred_check_branch
        %337 = sbr.rel (%p335) target = $region36
      $region35: #{merge_conv2d_forward.1} parent=31 // pred_region
        %s338 = smul.u32 2, %s19
      $region36: #{merge_conv2d_forward.1} parent=31 // pred_fallthru
        _
    $region32: #{merge_conv2d_forward.1} parent=5 // pred_fallthru
      _
    %p339 = scmp.le.s32.totalorder 2, %s9
    // Predicated region
    $region37: #{merge_conv2d_forward.1} parent=5 // pred_check
      %p340 = pneg %p339
    $region38: #{merge_conv2d_forward.1} parent=5 // pred_check_branch
      %342 = sbr.rel (%p340) target = $region40
    $region39: #{merge_conv2d_forward.1} parent=5 // pred_region
      %s343 = ssub.s32 %s9, 2
      // Predicated region
      $region41: #{merge_conv2d_forward.1} parent=39 // pred_check
        %p344 = pneg %p122
      $region42: #{merge_conv2d_forward.1} parent=39 // pred_check_branch
        %346 = sbr.rel (%p344) target = $region44
      $region43: #{merge_conv2d_forward.1} parent=39 // pred_region
        %s347 = smul.u32 2, %s21
        %p348 = scmp.lt.s32.totalorder %s20, 1
        %s349 = scalar_select %p348, %s20, 1
        %p350 = scmp.lt.s32.totalorder %s347, 1
        %s351 = scalar_select %p350, %s347, 1
        %s352 = smul.addr %s349, 2
        %s353 = sadd.s32 %s351, %s352
        %s354 = smul.addr %s353, 8
        %s355 = scalar_lea.vmem %s3, %s354
      $region44: #{merge_conv2d_forward.1} parent=39 // pred_fallthru
        _
    $region40: #{merge_conv2d_forward.1} parent=5 // pred_fallthru
      _
  $region6: #{merge_conv2d_forward.1} parent=0 // loop_footer
    %s13 = sadd.s32 1, %s9
  $region7: #{merge_conv2d_forward.1} parent=0 // loop_footer_branch
    %8 = sbr.rel target = $region3
  $region8: #{merge_conv2d_forward.1} parent=0 // loop_exit
    _

</llo_original>
